<compile_context>
chip_gen: v7x
topology: tpu7x:2x2x1
jax: 0.10.0
libtpu: 0.0.40
codegen_flags: <defaults>
</compile_context>

<pallas_src>
import jax
import jax.numpy as jnp
from jax.experimental import pallas as pl
from jax.experimental.pallas import tpu as pltpu


def _identity_kernel(x_ref, o_ref):
    # Entire forward pass of IdentityBN: o = x.
    o_ref[...] = x_ref[...]


_LANE_CANDIDATES = (4096, 2048, 1024, 512, 256, 128)
_TARGET_TILE_BYTES = 4 * 1024 * 1024  # per buffer; (in+out) * double-buffer ~= 16 MiB VMEM


def _lane_dense_2d_shape(shape, total):
    """Pick a (rows, lanes) factorization with lanes a large multiple of 128."""
    for lane in _LANE_CANDIDATES:
        if total % lane == 0:
            return total // lane, lane
    # Fallback: keep the original trailing dim as the lane axis.
    last = shape[-1] if len(shape) >= 1 and shape[-1] > 0 else 1
    return max(1, total // last), last


def _pick_tile_rows(num_rows, num_lanes, itemsize):
    """Largest row tile that keeps one buffer under ~4 MiB (multiple of 8)."""
    rows_for_budget = _TARGET_TILE_BYTES // max(1, num_lanes * itemsize)
    if rows_for_budget >= num_rows:
        return num_rows  # single block along rows == full dim (no 8-div needed)
    return max(8, (rows_for_budget // 8) * 8)


def identity_bn(x):
    """Pallas implementation of IdentityBN.forward: returns x unchanged.

    NOTE: the cheapest correct implementation is `return x`; this routes the
    data through a tiled, lane-dense, input-aliased Pallas copy so a real
    kernel executes while staying at (or near) the HBM roofline.
    """
    orig_shape = x.shape
    total = int(x.size)
    if total == 0:
        return x  # nothing to copy

    rows, lanes = _lane_dense_2d_shape(orig_shape, total)
    x2 = x.reshape(rows, lanes)

    itemsize = jnp.dtype(x2.dtype).itemsize
    tile_rows = _pick_tile_rows(rows, lanes, itemsize)
    grid = (pl.cdiv(rows, tile_rows),)
    nbytes = total * itemsize

    out2 = pl.pallas_call(
        _identity_kernel,
        out_shape=jax.ShapeDtypeStruct((rows, lanes), x2.dtype),
        grid=grid,
        in_specs=[pl.BlockSpec((tile_rows, lanes), lambda i: (i, 0))],
        out_specs=pl.BlockSpec((tile_rows, lanes), lambda i: (i, 0)),
        # Output aliases the (temporary, reshaped) input buffer: no extra HBM
        # output allocation for this pure-copy op.
        input_output_aliases={0: 0},
        compiler_params=pltpu.CompilerParams(
            dimension_semantics=("parallel",),
            vmem_limit_bytes=32 * 1024 * 1024,
        ),
        cost_estimate=pl.CostEstimate(
            flops=0, transcendentals=0, bytes_accessed=2 * nbytes
        ),
    )(x2)

    return out2.reshape(orig_shape)


if __name__ == "__main__":
    # IdentityBN.__init__ takes no parameters (no weights to initialize).
    key = jax.random.PRNGKey(0)
    shape = (2, 4, 16, 16)  # NCHW, small

    x = jax.random.normal(key, shape, dtype=jnp.float32)
    # Regenerate the same deterministic values as the reference (robust even
    # though aliasing only donates the internal reshaped temporary, not x).
    expected = jax.random.normal(key, shape, dtype=jnp.float32)

    y = identity_bn(x)
    y = jax.block_until_ready(y)

    assert y.shape == shape and y.dtype == jnp.float32
    assert bool(jnp.array_equal(y, expected))

    # Extra robustness check: element count not divisible by 128 (fallback
    # lane axis, full-array block).
    x_odd = jax.random.normal(jax.random.PRNGKey(1), (2, 3, 5, 7), jnp.float32)
    exp_odd = jax.random.normal(jax.random.PRNGKey(1), (2, 3, 5, 7), jnp.float32)
    y_odd = jax.block_until_ready(identity_bn(x_odd))
    assert y_odd.shape == x_odd.shape
    assert bool(jnp.array_equal(y_odd, exp_odd))

    print("KERNEL_OK")
</pallas_src>

<mosaic_0001>
module attributes {stable_mosaic.version = 11 : i64} {
  func.func @_identity_kernel(%arg0: i32, %arg1: memref<1x2048xf32, #tpu.memory_space<vmem>>, %arg2: memref<1x2048xf32, #tpu.memory_space<vmem>>) attributes {dimension_semantics = [#tpu.dimension_semantics<parallel>], iteration_bounds = array<i64: 1>, scalar_prefetch = 0 : i64, scratch_operands = 0 : i64, tpu.core_type = #tpu.core_type<tc>, window_params = [{transform_indices = @transform_0, window_bounds = array<i64: 1, 2048>}, {transform_indices = @transform_1, window_bounds = array<i64: 1, 2048>}]} {
    %c0 = arith.constant 0 : index
    %c0_0 = arith.constant 0 : index
    %0 = vector.load %arg1[%c0, %c0_0] : memref<1x2048xf32, #tpu.memory_space<vmem>>, vector<1x2048xf32>
    %c0_1 = arith.constant 0 : index
    %c0_2 = arith.constant 0 : index
    %1 = vector.load %arg2[%c0_1, %c0_2] : memref<1x2048xf32, #tpu.memory_space<vmem>>, vector<1x2048xf32>
    tpu.vector_store %arg2[%c0_1, %c0_2], %0 {strides = array<i32>} : memref<1x2048xf32, #tpu.memory_space<vmem>>, vector<1x2048xf32>,
    return
  }
  func.func @transform_0(%arg0: i32) -> (i32, i32) {
    %c0_i32 = arith.constant 0 : i32
    %c0_i32_0 = arith.constant 0 : i32
    return %arg0, %c0_i32 : i32, i32
  }
  func.func @transform_1(%arg0: i32) -> (i32, i32) {
    %c0_i32 = arith.constant 0 : i32
    %c0_i32_0 = arith.constant 0 : i32
    return %arg0, %c0_i32 : i32, i32
  }
}

</mosaic_0001>

<llo_original>
// kernel: tpu_custom_call.1
$region0: #{tpu_custom_call.1}
  #allocation0 [shape = 'u32[]', space=smem, size = 0x4, offset = 0x4, fixed_abs, tag = 'smem constant byte address 0x4 - core index']
  #allocation1 [shape = 'u32[144,128]{1,0:T(1,128)}', space=vmem, size = 0x12000, scoped, tag = 'internal scratch']
  %s0 = inlined_call_operand.hbm [shape: f32[1,2048], index: 0, kind: input, shape index: {}, may-alias: {0,1}]
  %s1 = inlined_call_operand.hbm [shape: f32[1,2048], index: 1, kind: output, shape index: {}, may-alias: {0,1}]
  %s2 = sld [smem:[#allocation0]]
  $region18: #{tpu_custom_call.1} parent=0
    _
  %s4 = ssub.s32 1, %s2
  %s5 = scalar_select 0, %s4, %s2
  $region1: #{tpu_custom_call.1} parent=0
    #allocation2 [shape = 'u8[8192]{0}', space=vmem, size = 0x2000, scoped, tag = 'input window, operand 0, single buffered']
    #allocation3 [shape = 's32[1]{0}', space=sflag, size = 0x4, scoped, tag = 'scoped memory for tpu_custom_call.1']
    #allocation4 [shape = 's32[1]{0}', space=sflag, size = 0x4, scoped, tag = 'scoped memory for tpu_custom_call.1']
    #allocation5 [shape = 'u8[8192]{0}', space=vmem, size = 0x2000, scoped, tag = 'output window, operand 0, single buffered']
    %6 = vsyncpa [#allocation3], 0
    %7 = vsyncpa [#allocation4], 0
    // Predicated region
    $region2: #{tpu_custom_call.1} parent=1 // pred_check
      _
    $region3: #{tpu_custom_call.1} parent=1 // pred_check_branch
      %9 = sbr.rel (0) target = $region5
    $region4: #{tpu_custom_call.1} parent=1 // pred_region
      %s11 = ssub.s32 256, 256
      %12 = vsyncadd [#allocation3], %s11
      %s14 = sshll.u32 [#allocation2], 4
      %s15 = int_to_ptr.vmem [resolvable:$true] %s14
      %17 = dma.hbm_to_vmem [thread:$0]  %s0, 256, %s15, [#allocation3]
    $region5: #{tpu_custom_call.1} parent=1 // pred_fallthru
      _
    // Predicated region
    $region6: #{tpu_custom_call.1} parent=1 // pred_check
      _
    $region7: #{tpu_custom_call.1} parent=1 // pred_check_branch
      %19 = sbr.rel (0) target = $region9
    $region8: #{tpu_custom_call.1} parent=1 // pred_region
      %20 = dma.done [#allocation3], 256
    $region9: #{tpu_custom_call.1} parent=1 // pred_fallthru
      _
    %v21 = vld [vmem:[#allocation2] sm:$0xff]
    %v22 = vld [vmem:[#allocation2 + $0x8] sm:$0xff]
    %23 = vst [vmem:[#allocation5] sm:$0xff] %v21
    %24 = vst [vmem:[#allocation5 + $0x8] sm:$0xff] %v22
    // Predicated region
    $region10: #{tpu_custom_call.1} parent=1 // pred_check
      _
    $region11: #{tpu_custom_call.1} parent=1 // pred_check_branch
      %26 = sbr.rel (0) target = $region13
    $region12: #{tpu_custom_call.1} parent=1 // pred_region
      %s28 = ssub.s32 256, 256
      %29 = vsyncadd [#allocation4], %s28
      %s31 = sshll.u32 [#allocation5], 4
      %s32 = int_to_ptr.vmem [resolvable:$true] %s31
      %34 = dma.vmem_to_hbm [thread:$0]  %s32, 256, %s1, [#allocation4]
    $region13: #{tpu_custom_call.1} parent=1 // pred_fallthru
      _
    // Predicated region
    $region14: #{tpu_custom_call.1} parent=1 // pred_check
      _
    $region15: #{tpu_custom_call.1} parent=1 // pred_check_branch
      %36 = sbr.rel (0) target = $region17
    $region16: #{tpu_custom_call.1} parent=1 // pred_region
      %37 = dma.done [#allocation4], 256
    $region17: #{tpu_custom_call.1} parent=1 // pred_fallthru
      _
    %38 = vsyncpa [#allocation3], 1
    %39 = vsyncpa [#allocation4], 1

</llo_original>
